<compile_context>
chip_gen: v7x
topology: tpu7x:2x2x1
jax: 0.10.0
libtpu: 0.0.40
codegen_flags: <defaults>
</compile_context>

<pallas_src>
import functools

import jax
import jax.numpy as jnp
from jax.experimental import pallas as pl
from jax.experimental.pallas import tpu as pltpu


def _round_up(x, m):
    return (x + m - 1) // m * m


@functools.lru_cache(maxsize=1)
def _tile_plan():
    """Per-TPU-generation (tm, tn, vmem_limit_bytes)."""
    kind = ""
    try:
        kind = jax.devices()[0].device_kind.lower()
    except Exception:
        pass
    vmem_bytes = None
    try:
        vmem_bytes = int(pltpu.get_tpu_info().vmem_capacity_bytes)
    except Exception:
        pass

    if "v7" in kind:
        # 64 MiB VMEM, 3.2 TB/s HBM: tm=512 already reaches roofline.
        tm, tn, default_vmem = 512, 512, 64 * 1024 * 1024
    elif "v5 lite" in kind or "v5e" in kind or "v5litepod" in kind:
        # 197 TF/s vs 0.82 TB/s -> MXU-bound early; modest tiles, 128-aligned.
        tm, tn, default_vmem = 384, 512, 128 * 1024 * 1024
    elif "v6" in kind or "v5p" in kind or "v5" in kind or "v4" in kind:
        # 128 MiB VMEM, needs ~675 FLOPs/byte -> big 256-aligned tiles.
        tm, tn, default_vmem = 1024, 1024, 128 * 1024 * 1024
    else:
        # Unknown generation: conservative plan that fits 64 MiB VMEM.
        tm, tn, default_vmem = 512, 512, 64 * 1024 * 1024

    if vmem_bytes is None:
        vmem_bytes = default_vmem
    # ~12.5% headroom for compiler-internal scratch, capped at ~100 MiB.
    vmem_limit = min(vmem_bytes - vmem_bytes // 8, 100 * 1024 * 1024)
    return tm, tn, vmem_limit


def _decoder_kernel(x_ref, w1_ref, b1_ref, w2_ref, b2_ref, out_ref, h_ref):
    """out[i,j] = tanh(x[i] @ W1 + b1) @ W2[:, j] + b2[j]  (h cached per row tile).

    h_ref cache validity depends on j (axis 1) being the innermost grid axis
    marked "arbitrary"; do not reorder the grid or shard j across cores.
    """

    @pl.when(pl.program_id(1) == 0)
    def _():
        # bf16 MXU matmul, f32 accumulation; bias + tanh in f32 (VPU/EUP).
        h = jnp.dot(x_ref[...], w1_ref[...], preferred_element_type=jnp.float32)
        h = jnp.tanh(h + b1_ref[...])
        h_ref[...] = h.astype(h_ref.dtype)

    logits = jnp.dot(h_ref[...], w2_ref[...], preferred_element_type=jnp.float32)
    out_ref[...] = (logits + b2_ref[...]).astype(out_ref.dtype)


def decoder_forward_pallas(x_flat, w1, b1, w2, b2, *, tm=None, tn=None,
                           out_dtype=jnp.bfloat16):
    """x_flat: (M, D) bf16 activations -> (M, V) logits (bf16), tiled over (M, V)."""
    M, D = x_flat.shape
    H = w1.shape[1]
    V = w2.shape[1]

    plan_tm, plan_tn, vmem_limit = _tile_plan()
    if tm is None:
        tm = plan_tm
    if tn is None:
        tn = plan_tn

    # Clamp tile sizes for small problems, keep (8, 128) alignment.
    tm = min(tm, _round_up(M, 8))
    tn = min(tn, _round_up(V, 128))
    Mp = _round_up(M, tm)
    Vp = _round_up(V, tn)

    if Mp != M:
        x_flat = jnp.pad(x_flat, ((0, Mp - M), (0, 0)))
    # Fallback only: the model pads W2/b2 ONCE at init so this is a no-op on
    # the hot path (per-call jnp.pad of the H x V weight is pure HBM overhead).
    if Vp != V:
        w2 = jnp.pad(w2, ((0, 0), (0, Vp - V)))
        b2 = jnp.pad(b2, ((0, 0), (0, Vp - V)))

    grid = (Mp // tm, Vp // tn)
    n_row_tiles = grid[0]

    out_itemsize = jnp.dtype(out_dtype).itemsize
    bytes_accessed = (
        Mp * D * x_flat.dtype.itemsize                 # x row tiles, read once
        + w1.size * w1.dtype.itemsize                  # W1 resident, read once
        + b1.size * b1.dtype.itemsize
        + n_row_tiles * (H * Vp * w2.dtype.itemsize    # W2/b2 re-streamed per row tile
                         + Vp * b2.dtype.itemsize)
        + Mp * Vp * out_itemsize                       # logits writeback
    )
    cost = pl.CostEstimate(
        flops=2 * Mp * (D * H + H * Vp),
        transcendentals=Mp * H,
        bytes_accessed=bytes_accessed,
    )

    def build(single_buffer_resident):
        if single_buffer_resident:
            # Grid-invariant operands: single-buffer to halve their VMEM footprint.
            w1_spec = pl.BlockSpec((D, H), lambda i, j: (0, 0),
                                   pipeline_mode=pl.Buffered(1))
            b1_spec = pl.BlockSpec((1, H), lambda i, j: (0, 0),
                                   pipeline_mode=pl.Buffered(1))
        else:
            w1_spec = pl.BlockSpec((D, H), lambda i, j: (0, 0))
            b1_spec = pl.BlockSpec((1, H), lambda i, j: (0, 0))
        return pl.pallas_call(
            _decoder_kernel,
            out_shape=jax.ShapeDtypeStruct((Mp, Vp), out_dtype),
            grid_spec=pltpu.PrefetchScalarGridSpec(
                num_scalar_prefetch=0,
                grid=grid,
                in_specs=[
                    pl.BlockSpec((tm, D), lambda i, j: (i, 0)),   # x row tile
                    w1_spec,                                      # W1: VMEM-resident
                    b1_spec,                                      # b1: VMEM-resident
                    pl.BlockSpec((H, tn), lambda i, j: (0, j)),   # W2: streamed over vocab
                    pl.BlockSpec((1, tn), lambda i, j: (0, j)),   # b2: slice per vocab tile
                ],
                out_specs=pl.BlockSpec((tm, tn), lambda i, j: (i, j)),
                scratch_shapes=[pltpu.VMEM((tm, H), jnp.bfloat16)],  # cached hidden tile
            ),
            compiler_params=pltpu.CompilerParams(
                dimension_semantics=("parallel", "arbitrary"),  # i across TCs; j must stay arbitrary
                vmem_limit_bytes=vmem_limit,
            ),
            cost_estimate=cost,
        )

    try:
        out = build(True)(x_flat, w1, b1, w2, b2)
    except Exception:
        # Fallback if pipeline_mode=pl.Buffered(1) is unsupported in this jax build.
        out = build(False)(x_flat, w1, b1, w2, b2)

    return out[:M, :V]


class FairseqLanguageModelPallas:
    """JAX/Pallas mirror of FairseqLanguageModel wrapping a simple decoder."""

    def __init__(self, vocab_size, embed_dim, hidden_dim, max_pos=1024, key=None):
        if key is None:
            key = jax.random.PRNGKey(0)
        k_emb, k_w1, k_w2 = jax.random.split(key, 3)
        # bf16 weight storage halves the dominant HBM streams (W2, embeddings);
        # all matmuls accumulate in f32 on the MXU, biases stay f32.
        self.embed_tokens = (
            jax.random.normal(k_emb, (vocab_size, embed_dim), jnp.float32) * 0.02
        ).astype(jnp.bfloat16)
        self.w1 = (
            jax.random.normal(k_w1, (embed_dim, hidden_dim), jnp.float32) * 0.02
        ).astype(jnp.bfloat16)
        self.b1 = jnp.zeros((1, hidden_dim), jnp.float32)

        w2 = (
            jax.random.normal(k_w2, (hidden_dim, vocab_size), jnp.float32) * 0.02
        ).astype(jnp.bfloat16)
        b2 = jnp.zeros((1, vocab_size), jnp.float32)

        # Pad the vocab dimension ONCE at init so the per-call path never pads
        # the (H, V) weight (that would re-read/write the largest tensor in HBM
        # on every forward).
        _, plan_tn, _ = _tile_plan()
        tn_eff = min(plan_tn, _round_up(vocab_size, 128))
        vocab_padded = _round_up(vocab_size, tn_eff)
        if vocab_padded != vocab_size:
            w2 = jnp.pad(w2, ((0, 0), (0, vocab_padded - vocab_size)))
            b2 = jnp.pad(b2, ((0, 0), (0, vocab_padded - vocab_size)))
        self.w2 = w2
        self.b2 = b2

        self._vocab = vocab_size
        self._max_positions = max_pos

    def decoder(self, src_tokens):
        B, T = src_tokens.shape
        # Embedding gather (glue, plain JAX, bf16 table).
        # TODO(synk): fuse this gather in-kernel via scalar-prefetch row gather.
        x = jnp.take(self.embed_tokens, src_tokens, axis=0)      # (B, T, D) bf16
        x_flat = x.reshape(B * T, -1)                             # (B*T, D)
        logits_flat = decoder_forward_pallas(
            x_flat, self.w1, self.b1, self.w2, self.b2
        )
        logits_flat = logits_flat[:, : self._vocab]               # drop vocab padding
        return logits_flat.reshape(B, T, self._vocab)             # (B, T, V) bf16

    def forward(self, src_tokens, src_lengths):
        # Matches FairseqLanguageModel.forward: src_lengths accepted but unused.
        return self.decoder(src_tokens)

    def __call__(self, src_tokens, src_lengths):
        return self.forward(src_tokens, src_lengths)

    def max_positions(self):
        return self._max_positions

    @property
    def supported_targets(self):
        return {"future"}

    def get_normalized_probs(self, net_output, log_probs, sample=None):
        # Upcast bf16 logits to f32 before (log_)softmax to preserve accuracy.
        logits = net_output.astype(jnp.float32)
        if log_probs:
            return jax.nn.log_softmax(logits, axis=-1)
        return jax.nn.softmax(logits, axis=-1)


def _reference_decoder(x_flat_bf16, w1, b1, w2, b2):
    """Pure-JAX reference with the SAME precision policy as the kernel (f32 acc)."""
    h = jnp.dot(x_flat_bf16, w1, preferred_element_type=jnp.float32)
    h = jnp.tanh(h + b1).astype(jnp.bfloat16)
    return jnp.dot(h, w2, preferred_element_type=jnp.float32) + b2


if __name__ == "__main__":
    key = jax.random.PRNGKey(0)
    k_tok, k_model = jax.random.split(key)

    batch, seq_len = 2, 8
    vocab_size, embed_dim, hidden_dim = 256, 32, 64

    src_tokens = jax.random.randint(k_tok, (batch, seq_len), 0, vocab_size, jnp.int32)
    src_lengths = jnp.full((batch,), seq_len, jnp.int32)

    model = FairseqLanguageModelPallas(vocab_size, embed_dim, hidden_dim, key=k_model)

    # Full forward pass (single-tile path at these toy shapes).
    logits = model(src_tokens, src_lengths)
    logits = jax.block_until_ready(logits)
    assert logits.shape == (batch, seq_len, vocab_size)
    assert logits.dtype == jnp.bfloat16

    # Precision-matched reference (f32 accumulation; kernel rounds the final
    # store to bf16).
    x_flat = jnp.take(model.embed_tokens, src_tokens, axis=0).reshape(
        batch * seq_len, -1
    )
    ref = _reference_decoder(
        x_flat, model.w1, model.b1, model.w2, model.b2
    )[:, :vocab_size].reshape(batch, seq_len, vocab_size)
    assert jnp.allclose(logits.astype(jnp.float32), ref, atol=2e-3, rtol=2e-2)

    # Exercise the multi-tile (2 x 2 grid) path with small explicit tiles:
    # checks the per-row-tile h cache reuse across vocab tiles and the
    # parallel-i / arbitrary-j grid.
    tiled = decoder_forward_pallas(
        x_flat, model.w1, model.b1, model.w2, model.b2, tm=8, tn=128
    )
    tiled = jax.block_until_ready(tiled)
    tiled = tiled[:, :vocab_size].astype(jnp.float32).reshape(
        batch, seq_len, vocab_size
    )
    assert jnp.allclose(tiled, ref, atol=2e-3, rtol=2e-2)

    # Softmax path (upcasts to f32 internally).
    probs = model.get_normalized_probs(logits, log_probs=False)
    probs = jax.block_until_ready(probs)
    assert jnp.allclose(probs.sum(-1), 1.0, atol=1e-3)

    print("KERNEL_OK")
</pallas_src>

<mosaic_0001>
module attributes {stable_mosaic.version = 11 : i64} {
  func.func @_decoder_kernel(%arg0: i32, %arg1: i32, %arg2: memref<16x32xbf16, #tpu.memory_space<vmem>>, %arg3: memref<32x64xbf16, #tpu.memory_space<vmem>>, %arg4: memref<1x64xf32, #tpu.memory_space<vmem>>, %arg5: memref<64x256xbf16, #tpu.memory_space<vmem>>, %arg6: memref<1x256xf32, #tpu.memory_space<vmem>>, %arg7: memref<16x256xbf16, #tpu.memory_space<vmem>>, %arg8: memref<16x64xbf16, #tpu.memory_space<vmem>>) attributes {dimension_semantics = [#tpu.dimension_semantics<parallel>, #tpu.dimension_semantics<arbitrary>], iteration_bounds = array<i64: 1, 1>, scalar_prefetch = 0 : i64, scratch_operands = 1 : i64, tpu.core_type = #tpu.core_type<tc>, window_params = [{transform_indices = @transform_0, window_bounds = array<i64: 16, 32>}, {pipeline_mode = #tpu.pipeline_mode<synchronous>, transform_indices = @transform_1, window_bounds = array<i64: 32, 64>}, {pipeline_mode = #tpu.pipeline_mode<synchronous>, transform_indices = @transform_2, window_bounds = array<i64: 1, 64>}, {transform_indices = @transform_3, window_bounds = array<i64: 64, 256>}, {transform_indices = @transform_4, window_bounds = array<i64: 1, 256>}, {transform_indices = @transform_5, window_bounds = array<i64: 16, 256>}]} {
    %c0_i32 = arith.constant 0 : i32
    %0 = arith.cmpi eq, %arg1, %c0_i32 : i32
    %1 = arith.extui %0 : i1 to i32
    %c0_i32_0 = arith.constant 0 : i32
    %2 = arith.cmpi ne, %1, %c0_i32_0 : i32
    scf.if %2 {
      %c0_8 = arith.constant 0 : index
      %c0_9 = arith.constant 0 : index
      %11 = vector.load %arg2[%c0_8, %c0_9] : memref<16x32xbf16, #tpu.memory_space<vmem>>, vector<16x32xbf16>
      %c0_10 = arith.constant 0 : index
      %c0_11 = arith.constant 0 : index
      %12 = vector.load %arg3[%c0_10, %c0_11] : memref<32x64xbf16, #tpu.memory_space<vmem>>, vector<32x64xbf16>
      %cst_12 = arith.constant dense<0.000000e+00> : vector<16x64xf32>
      %13 = tpu.matmul %11, %12, %cst_12 {dimension_numbers = #tpu.dot_dimension_numbers<[1], [0], [0], [1], [0, 0, 1, 1], [], []>} : vector<16x32xbf16>, vector<32x64xbf16>, vector<16x64xf32> -> vector<16x64xf32>
      %c0_13 = arith.constant 0 : index
      %c0_14 = arith.constant 0 : index
      %14 = vector.load %arg4[%c0_13, %c0_14] : memref<1x64xf32, #tpu.memory_space<vmem>>, vector<1x64xf32>
      %15 = vector.broadcast %14 : vector<1x64xf32> to vector<16x64xf32>
      %16 = arith.addf %13, %15 : vector<16x64xf32>
      %17 = math.tanh %16 : vector<16x64xf32>
      %18 = arith.truncf %17 : vector<16x64xf32> to vector<16x64xbf16>
      %c0_15 = arith.constant 0 : index
      %c0_16 = arith.constant 0 : index
      %19 = vector.load %arg8[%c0_15, %c0_16] : memref<16x64xbf16, #tpu.memory_space<vmem>>, vector<16x64xbf16>
      tpu.vector_store %arg8[%c0_15, %c0_16], %18 {strides = array<i32>} : memref<16x64xbf16, #tpu.memory_space<vmem>>, vector<16x64xbf16>,
    } else {
    }
    %c0 = arith.constant 0 : index
    %c0_1 = arith.constant 0 : index
    %3 = vector.load %arg8[%c0, %c0_1] : memref<16x64xbf16, #tpu.memory_space<vmem>>, vector<16x64xbf16>
    %c0_2 = arith.constant 0 : index
    %c0_3 = arith.constant 0 : index
    %4 = vector.load %arg5[%c0_2, %c0_3] : memref<64x256xbf16, #tpu.memory_space<vmem>>, vector<64x256xbf16>
    %cst = arith.constant dense<0.000000e+00> : vector<16x256xf32>
    %5 = tpu.matmul %3, %4, %cst {dimension_numbers = #tpu.dot_dimension_numbers<[1], [0], [0], [1], [0, 0, 1, 1], [], []>} : vector<16x64xbf16>, vector<64x256xbf16>, vector<16x256xf32> -> vector<16x256xf32>
    %c0_4 = arith.constant 0 : index
    %c0_5 = arith.constant 0 : index
    %6 = vector.load %arg6[%c0_4, %c0_5] : memref<1x256xf32, #tpu.memory_space<vmem>>, vector<1x256xf32>
    %7 = vector.broadcast %6 : vector<1x256xf32> to vector<16x256xf32>
    %8 = arith.addf %5, %7 : vector<16x256xf32>
    %9 = arith.truncf %8 : vector<16x256xf32> to vector<16x256xbf16>
    %c0_6 = arith.constant 0 : index
    %c0_7 = arith.constant 0 : index
    %10 = vector.load %arg7[%c0_6, %c0_7] : memref<16x256xbf16, #tpu.memory_space<vmem>>, vector<16x256xbf16>
    tpu.vector_store %arg7[%c0_6, %c0_7], %9 {strides = array<i32>} : memref<16x256xbf16, #tpu.memory_space<vmem>>, vector<16x256xbf16>,
    return
  }
  func.func @transform_0(%arg0: i32, %arg1: i32) -> (i32, i32) {
    %c0_i32 = arith.constant 0 : i32
    %c0_i32_0 = arith.constant 0 : i32
    return %arg0, %c0_i32 : i32, i32
  }
  func.func @transform_1(%arg0: i32, %arg1: i32) -> (i32, i32) {
    %c0_i32 = arith.constant 0 : i32
    %c0_i32_0 = arith.constant 0 : i32
    %c0_i32_1 = arith.constant 0 : i32
    return %c0_i32, %c0_i32_0 : i32, i32
  }
  func.func @transform_2(%arg0: i32, %arg1: i32) -> (i32, i32) {
    %c0_i32 = arith.constant 0 : i32
    %c0_i32_0 = arith.constant 0 : i32
    %c0_i32_1 = arith.constant 0 : i32
    return %c0_i32, %c0_i32_0 : i32, i32
  }
  func.func @transform_3(%arg0: i32, %arg1: i32) -> (i32, i32) {
    %c0_i32 = arith.constant 0 : i32
    %c0_i32_0 = arith.constant 0 : i32
    return %c0_i32, %arg1 : i32, i32
  }
  func.func @transform_4(%arg0: i32, %arg1: i32) -> (i32, i32) {
    %c0_i32 = arith.constant 0 : i32
    %c0_i32_0 = arith.constant 0 : i32
    return %c0_i32, %arg1 : i32, i32
  }
  func.func @transform_5(%arg0: i32, %arg1: i32) -> (i32, i32) {
    %c0_i32 = arith.constant 0 : i32
    return %arg0, %arg1 : i32, i32
  }
}

module attributes {stable_mosaic.version = 11 : i64} {
  func.func @_decoder_kernel(%arg0: i32, %arg1: i32, %arg2: memref<16x32xbf16, #tpu.memory_space<vmem>>, %arg3: memref<32x64xbf16, #tpu.memory_space<vmem>>, %arg4: memref<1x64xf32, #tpu.memory_space<vmem>>, %arg5: memref<64x256xbf16, #tpu.memory_space<vmem>>, %arg6: memref<1x256xf32, #tpu.memory_space<vmem>>, %arg7: memref<16x256xbf16, #tpu.memory_space<vmem>>, %arg8: memref<16x64xbf16, #tpu.memory_space<vmem>>) attributes {dimension_semantics = [#tpu.dimension_semantics<parallel>, #tpu.dimension_semantics<arbitrary>], iteration_bounds = array<i64: 1, 1>, scalar_prefetch = 0 : i64, scratch_operands = 1 : i64, tpu.core_type = #tpu.core_type<tc>, window_params = [{transform_indices = @transform_0, window_bounds = array<i64: 16, 32>}, {pipeline_mode = #tpu.pipeline_mode<synchronous>, transform_indices = @transform_1, window_bounds = array<i64: 32, 64>}, {pipeline_mode = #tpu.pipeline_mode<synchronous>, transform_indices = @transform_2, window_bounds = array<i64: 1, 64>}, {transform_indices = @transform_3, window_bounds = array<i64: 64, 256>}, {transform_indices = @transform_4, window_bounds = array<i64: 1, 256>}, {transform_indices = @transform_5, window_bounds = array<i64: 16, 256>}]} {
    %c0_i32 = arith.constant 0 : i32
    %0 = arith.cmpi eq, %arg1, %c0_i32 : i32
    %1 = arith.extui %0 : i1 to i32
    %c0_i32_0 = arith.constant 0 : i32
    %2 = arith.cmpi ne, %1, %c0_i32_0 : i32
    scf.if %2 {
      %c0_8 = arith.constant 0 : index
      %c0_9 = arith.constant 0 : index
      %11 = vector.load %arg2[%c0_8, %c0_9] : memref<16x32xbf16, #tpu.memory_space<vmem>>, vector<16x32xbf16>
      %c0_10 = arith.constant 0 : index
      %c0_11 = arith.constant 0 : index
      %12 = vector.load %arg3[%c0_10, %c0_11] : memref<32x64xbf16, #tpu.memory_space<vmem>>, vector<32x64xbf16>
      %cst_12 = arith.constant dense<0.000000e+00> : vector<16x64xf32>
      %13 = tpu.matmul %11, %12, %cst_12 {dimension_numbers = #tpu.dot_dimension_numbers<[1], [0], [0], [1], [0, 0, 1, 1], [], []>} : vector<16x32xbf16>, vector<32x64xbf16>, vector<16x64xf32> -> vector<16x64xf32>
      %c0_13 = arith.constant 0 : index
      %c0_14 = arith.constant 0 : index
      %14 = vector.load %arg4[%c0_13, %c0_14] : memref<1x64xf32, #tpu.memory_space<vmem>>, vector<1x64xf32>
      %15 = vector.broadcast %14 : vector<1x64xf32> to vector<16x64xf32>
      %16 = arith.addf %13, %15 : vector<16x64xf32>
      %17 = math.tanh %16 : vector<16x64xf32>
      %18 = arith.truncf %17 : vector<16x64xf32> to vector<16x64xbf16>
      %c0_15 = arith.constant 0 : index
      %c0_16 = arith.constant 0 : index
      %19 = vector.load %arg8[%c0_15, %c0_16] : memref<16x64xbf16, #tpu.memory_space<vmem>>, vector<16x64xbf16>
      tpu.vector_store %arg8[%c0_15, %c0_16], %18 {strides = array<i32>} : memref<16x64xbf16, #tpu.memory_space<vmem>>, vector<16x64xbf16>,
    } else {
    }
    %c0 = arith.constant 0 : index
    %c0_1 = arith.constant 0 : index
    %3 = vector.load %arg8[%c0, %c0_1] : memref<16x64xbf16, #tpu.memory_space<vmem>>, vector<16x64xbf16>
    %c0_2 = arith.constant 0 : index
    %c0_3 = arith.constant 0 : index
    %4 = vector.load %arg5[%c0_2, %c0_3] : memref<64x256xbf16, #tpu.memory_space<vmem>>, vector<64x256xbf16>
    %cst = arith.constant dense<0.000000e+00> : vector<16x256xf32>
    %5 = tpu.matmul %3, %4, %cst {dimension_numbers = #tpu.dot_dimension_numbers<[1], [0], [0], [1], [0, 0, 1, 1], [], []>} : vector<16x64xbf16>, vector<64x256xbf16>, vector<16x256xf32> -> vector<16x256xf32>
    %c0_4 = arith.constant 0 : index
    %c0_5 = arith.constant 0 : index
    %6 = vector.load %arg6[%c0_4, %c0_5] : memref<1x256xf32, #tpu.memory_space<vmem>>, vector<1x256xf32>
    %7 = vector.broadcast %6 : vector<1x256xf32> to vector<16x256xf32>
    %8 = arith.addf %5, %7 : vector<16x256xf32>
    %9 = arith.truncf %8 : vector<16x256xf32> to vector<16x256xbf16>
    %c0_6 = arith.constant 0 : index
    %c0_7 = arith.constant 0 : index
    %10 = vector.load %arg7[%c0_6, %c0_7] : memref<16x256xbf16, #tpu.memory_space<vmem>>, vector<16x256xbf16>
    tpu.vector_store %arg7[%c0_6, %c0_7], %9 {strides = array<i32>} : memref<16x256xbf16, #tpu.memory_space<vmem>>, vector<16x256xbf16>,
    return
  }
  func.func @transform_0(%arg0: i32, %arg1: i32) -> (i32, i32) {
    %c0_i32 = arith.constant 0 : i32
    %c0_i32_0 = arith.constant 0 : i32
    return %arg0, %c0_i32 : i32, i32
  }
  func.func @transform_1(%arg0: i32, %arg1: i32) -> (i32, i32) {
    %c0_i32 = arith.constant 0 : i32
    %c0_i32_0 = arith.constant 0 : i32
    %c0_i32_1 = arith.constant 0 : i32
    return %c0_i32, %c0_i32_0 : i32, i32
  }
  func.func @transform_2(%arg0: i32, %arg1: i32) -> (i32, i32) {
    %c0_i32 = arith.constant 0 : i32
    %c0_i32_0 = arith.constant 0 : i32
    %c0_i32_1 = arith.constant 0 : i32
    return %c0_i32, %c0_i32_0 : i32, i32
  }
  func.func @transform_3(%arg0: i32, %arg1: i32) -> (i32, i32) {
    %c0_i32 = arith.constant 0 : i32
    %c0_i32_0 = arith.constant 0 : i32
    return %c0_i32, %arg1 : i32, i32
  }
  func.func @transform_4(%arg0: i32, %arg1: i32) -> (i32, i32) {
    %c0_i32 = arith.constant 0 : i32
    %c0_i32_0 = arith.constant 0 : i32
    return %c0_i32, %arg1 : i32, i32
  }
  func.func @transform_5(%arg0: i32, %arg1: i32) -> (i32, i32) {
    %c0_i32 = arith.constant 0 : i32
    return %arg0, %arg1 : i32, i32
  }
}

</mosaic_0001>

<llo_original>
// kernel: tpu_custom_call.1
$region0: #{tpu_custom_call.1}
  #allocation0 [shape = 'u32[]', space=smem, size = 0x4, offset = 0x4, fixed_abs, tag = 'smem constant byte address 0x4 - core index']
  #allocation1 [shape = 'u32[144,128]{1,0:T(1,128)}', space=vmem, size = 0x12000, scoped, tag = 'internal scratch']
  #allocation2 [shape = 'bf16[16,64]{1,0:T(16,128)(2,1)}', space=vmem, size = 0x1000, scoped, tag = 'scratch operand']
  %s0 = inlined_call_operand.hbm [shape: bf16[16,32], index: 0, kind: input, shape index: {}]
  %s1 = inlined_call_operand.hbm [shape: bf16[32,64], index: 1, kind: input, shape index: {}]
  %s2 = inlined_call_operand.vmem [shape: f32[1,64], index: 2, kind: input, shape index: {}]
  %s3 = inlined_call_operand.hbm [shape: bf16[64,256], index: 3, kind: input, shape index: {}]
  %s4 = inlined_call_operand.vmem [shape: f32[1,256], index: 4, kind: input, shape index: {}]
  %s5 = inlined_call_operand.hbm [shape: bf16[16,256], index: 5, kind: output, shape index: {}]
  %s6 = sld [smem:[#allocation0]]
  $region46: #{tpu_custom_call.1} parent=0
    _
  %s8 = ssub.s32 1, %s6
  %s9 = scalar_select 0, %s8, %s6
  $region1: #{tpu_custom_call.1} parent=0
    #allocation3 [shape = 'u8[4096]{0}', space=vmem, size = 0x1000, scoped, tag = 'input window, operand 0, single buffered']
    #allocation4 [shape = 's32[1]{0}', space=sflag, size = 0x4, scoped, tag = 'scoped memory for tpu_custom_call.1']
    #allocation5 [shape = 's32[1]{0}', space=sflag, size = 0x4, scoped, tag = 'scoped memory for tpu_custom_call.1']
    #allocation6 [shape = 'u8[8192]{0}', space=vmem, size = 0x2000, scoped, tag = 'input window, operand 1, single buffered']
    #allocation7 [shape = 's32[1]{0}', space=sflag, size = 0x4, scoped, tag = 'scoped memory for tpu_custom_call.1']
    #allocation8 [shape = 'u8[32768]{0}', space=vmem, size = 0x8000, scoped, tag = 'input window, operand 3, single buffered']
    #allocation9 [shape = 'u8[8192]{0}', space=vmem, size = 0x2000, scoped, tag = 'output window, operand 0, single buffered']
    %10 = vsyncpa [#allocation4], 0
    %11 = vsyncpa [#allocation7], 0
    %12 = vsyncpa [#allocation5], 0
    // Predicated region
    $region2: #{tpu_custom_call.1} parent=1 // pred_check
      _
    $region3: #{tpu_custom_call.1} parent=1 // pred_check_branch
      %14 = sbr.rel (0) target = $region5
    $region4: #{tpu_custom_call.1} parent=1 // pred_region
      %s16 = ssub.s32 128, 128
      %17 = vsyncadd [#allocation4], %s16
      %s18 = sshll.u32 [#allocation3], 4
      %s19 = int_to_ptr.vmem [resolvable:$true] %s18
      %24 = dma.hbm_to_vmem [thread:$0]  %s0, 128, %s19, [#allocation4], 64, 64, 4
    $region5: #{tpu_custom_call.1} parent=1 // pred_fallthru
      _
    // Predicated region
    $region6: #{tpu_custom_call.1} parent=1 // pred_check
      _
    $region7: #{tpu_custom_call.1} parent=1 // pred_check_branch
      %26 = sbr.rel (0) target = $region9
    $region8: #{tpu_custom_call.1} parent=1 // pred_region
      %s28 = ssub.s32 256, 256
      %29 = vsyncadd [#allocation7], %s28
      %s30 = sshll.u32 [#allocation6], 4
      %s31 = int_to_ptr.vmem [resolvable:$true] %s30
      %36 = dma.hbm_to_vmem [thread:$0]  %s1, 256, %s31, [#allocation7], 64, 64, 4
    $region9: #{tpu_custom_call.1} parent=1 // pred_fallthru
      _
    // Predicated region
    $region10: #{tpu_custom_call.1} parent=1 // pred_check
      _
    $region11: #{tpu_custom_call.1} parent=1 // pred_check_branch
      %38 = sbr.rel (0) target = $region13
    $region12: #{tpu_custom_call.1} parent=1 // pred_region
      _
    $region13: #{tpu_custom_call.1} parent=1 // pred_fallthru
      _
    // Predicated region
    $region14: #{tpu_custom_call.1} parent=1 // pred_check
      _
    $region15: #{tpu_custom_call.1} parent=1 // pred_check_branch
      %40 = sbr.rel (0) target = $region17
    $region16: #{tpu_custom_call.1} parent=1 // pred_region
      %s42 = ssub.s32 1024, 1024
      %43 = vsyncadd [#allocation7], %s42
      %s44 = sshll.u32 [#allocation8], 4
      %s45 = int_to_ptr.vmem [resolvable:$true] %s44
      %50 = dma.hbm_to_vmem [thread:$0]  %s3, 1024, %s45, [#allocation7], 128, 128, 8
    $region17: #{tpu_custom_call.1} parent=1 // pred_fallthru
      _
    // Predicated region
    $region18: #{tpu_custom_call.1} parent=1 // pred_check
      _
    $region19: #{tpu_custom_call.1} parent=1 // pred_check_branch
      %52 = sbr.rel (0) target = $region21
    $region20: #{tpu_custom_call.1} parent=1 // pred_region
      _
    $region21: #{tpu_custom_call.1} parent=1 // pred_fallthru
      _
    // Predicated region
    $region22: #{tpu_custom_call.1} parent=1 // pred_check
      _
    $region23: #{tpu_custom_call.1} parent=1 // pred_check_branch
      %54 = sbr.rel (0) target = $region25
    $region24: #{tpu_custom_call.1} parent=1 // pred_region
      %55 = dma.done [#allocation4], 128
    $region25: #{tpu_custom_call.1} parent=1 // pred_fallthru
      _
    // Predicated region
    $region26: #{tpu_custom_call.1} parent=1 // pred_check
      _
    $region27: #{tpu_custom_call.1} parent=1 // pred_check_branch
      %57 = sbr.rel (0) target = $region29
    $region28: #{tpu_custom_call.1} parent=1 // pred_region
      %58 = dma.done [#allocation7], 256
    $region29: #{tpu_custom_call.1} parent=1 // pred_fallthru
      _
    // Predicated region
    $region30: #{tpu_custom_call.1} parent=1 // pred_check
      _
    $region31: #{tpu_custom_call.1} parent=1 // pred_check_branch
      %60 = sbr.rel (0) target = $region33
    $region32: #{tpu_custom_call.1} parent=1 // pred_region
      %61 = dma.done [#allocation7], 1024
    $region33: #{tpu_custom_call.1} parent=1 // pred_fallthru
      _
    %p63 = scmp.eq.s32.totalorder 0, 0
    // Predicated region
    $region34: #{tpu_custom_call.1} parent=1 // pred_check
      %p64 = pneg %p63
    $region35: #{tpu_custom_call.1} parent=1 // pred_check_branch
      %66 = sbr.rel (%p64) target = $region37
    $region36: #{tpu_custom_call.1} parent=1 // pred_region
      %v67 = vld [vmem:[#allocation3] sm:$0xf]
      %v68 = vld [vmem:[#allocation3 + $0x4] sm:$0xf]
      %v69 = vld [vmem:[#allocation6] sm:$0xf]
      %v70 = vld [vmem:[#allocation6 + $0x4] sm:$0xf]
      %v71 = vld [vmem:[#allocation6 + $0x8] sm:$0xf]
      %v72 = vld [vmem:[#allocation6 + $0xc] sm:$0xf]
      %v73 = vld [vmem:[%s2] sm:$0x1]
      %v75 = vlaneseq
      %v76 = vshrl.u32 %v75, 7
      %v77 = vsub.s32 0, %v76
      %v78 = vrot.slane %v73, %v77
      %v82 = vunpack.c.l.b16 %v67
      %v83 = vunpack.c.l.b16 %v68
      %v84 = vpack.c.b16 %v83, %v82
      %v89 = vunpack.c.l.b16 %v69
      %v90 = vunpack.c.l.b16 %v70
      %v91 = vunpack.c.l.b16 %v71
      %v92 = vunpack.c.l.b16 %v72
      %v93 = vpack.c.b16 %v90, %v89
      %v94 = vpack.c.b16 %v92, %v91
      %vm97 = vcmask 261120
      %v99 = vsel %vm97, %v84, 0
      %101 = vmatprep.subr.bf16.mxu0 0
      %102 = vmatpush1.bf16.msra.mxu0 %v93
      %103 = vmatprep.subr.bf16.mxu0 0
      %104 = vmatpush1.bf16.msra.mxu0 %v94
      %105 = vmatprep.subr.bf16.mxu0 0
      %106 = vmatpush1.bf16.msra.mxu0 0
      %107 = vmatprep.subr.bf16.mxu0 0
      %108 = vmatpush1.bf16.msra.mxu0 0
      %109 = vmatprep.subr.bf16.mxu0 0
      %110 = vmatpush1.bf16.msra.mxu0 0
      %111 = vmatprep.subr.bf16.mxu0 0
      %112 = vmatpush1.bf16.msra.mxu0 0
      %113 = vmatprep.subr.bf16.mxu0 0
      %114 = vmatpush1.bf16.msra.mxu0 0
      %115 = vmatprep.subr.bf16.mxu0 0
      %116 = vmatpush1.bf16.msra.mxu0 0
      %117 = vmatprep.subr.bf16.mxu0 0
      %118 = vmatpush1.bf16.msra.mxu0 0
      %119 = vmatprep.subr.bf16.mxu0 0
      %120 = vmatpush1.bf16.msra.mxu0 0
      %121 = vmatprep.subr.bf16.mxu0 0
      %122 = vmatpush1.bf16.msra.mxu0 0
      %123 = vmatprep.subr.bf16.mxu0 0
      %124 = vmatpush1.bf16.msra.mxu0 0
      %125 = vmatprep.subr.bf16.mxu0 0
      %126 = vmatpush1.bf16.msra.mxu0 0
      %127 = vmatprep.subr.bf16.mxu0 0
      %128 = vmatpush1.bf16.msra.mxu0 0
      %129 = vmatprep.subr.bf16.mxu0 0
      %130 = vmatpush1.bf16.msra.mxu0 0
      %131 = vmatprep.subr.bf16.mxu0 0
      %132 = vmatpush1.bf16.msra.mxu0 0
      %133 = vmatprep.mubr.bf16.mxu0 0
      %134 = vmatmul.mubr.bf16.gmra.mrb[0].mxu0 %v99
      %v135 = vpop.f32.mrb[0].mxu0
      %v136 = vadd.f32 %v78, %v135
      %v137 = vpop.f32.mrb[0].mxu0
      %v138 = vpop.f32.mrb[0].mxu0
      %v139 = vadd.f32 %v78, %v138
      %v140 = vpop.f32.mrb[0].mxu0
      %141 = vdwg.mxu0
      %v142 = vtanh.pop %v136
      %v143 = vtanh.pop %v139
      %v144 = vpack.c.bf16 %v143, %v142
      %vm145 = vcmask 523264
      %146 = vst.msk [vmem:[#allocation2] sm:$0xff] %vm145, %v144
    $region37: #{tpu_custom_call.1} parent=1 // pred_fallthru
      _
    %v147 = vld [vmem:[#allocation2] sm:$0xff]
    %v148 = vld [vmem:[#allocation8] sm:$0xff]
    %v149 = vld [vmem:[#allocation8 + $0x8] sm:$0xff]
    %v150 = vld [vmem:[#allocation8 + $0x10] sm:$0xff]
    %v151 = vld [vmem:[#allocation8 + $0x18] sm:$0xff]
    %v152 = vld [vmem:[#allocation8 + $0x20] sm:$0xff]
    %v153 = vld [vmem:[#allocation8 + $0x28] sm:$0xff]
    %v154 = vld [vmem:[#allocation8 + $0x30] sm:$0xff]
    %v155 = vld [vmem:[#allocation8 + $0x38] sm:$0xff]
    %v156 = vld [vmem:[%s4] sm:$0x3]
    %v158 = vlaneseq
    %v159 = vshrl.u32 %v158, 7
    %v160 = vsub.s32 0, %v159
    %v161 = vrot.slane %v156, %v160
    %v162 = vlaneseq
    %v163 = vshrl.u32 %v162, 7
    %v164 = vsub.s32 1, %v163
    %v165 = vrot.slane %v156, %v164
    %v176 = vunpack.c.l.b16 %v148
    %v177 = vunpack.c.h.b16 %v148
    %v178 = vunpack.c.l.b16 %v149
    %v179 = vunpack.c.h.b16 %v149
    %v180 = vunpack.c.l.b16 %v150
    %v181 = vunpack.c.h.b16 %v150
    %v182 = vunpack.c.l.b16 %v151
    %v183 = vunpack.c.h.b16 %v151
    %v184 = vunpack.c.l.b16 %v152
    %v185 = vunpack.c.h.b16 %v152
    %v186 = vunpack.c.l.b16 %v153
    %v187 = vunpack.c.h.b16 %v153
    %v188 = vunpack.c.l.b16 %v154
    %v189 = vunpack.c.h.b16 %v154
    %v190 = vunpack.c.l.b16 %v155
    %v191 = vunpack.c.h.b16 %v155
    %v192 = vpack.c.b16 %v178, %v176
    %v193 = vpack.c.b16 %v179, %v177
    %v194 = vpack.c.b16 %v182, %v180
    %v195 = vpack.c.b16 %v183, %v181
    %v196 = vpack.c.b16 %v186, %v184
    %v197 = vpack.c.b16 %v187, %v185
    %v198 = vpack.c.b16 %v190, %v188
    %v199 = vpack.c.b16 %v191, %v189
    %vm208 = vcmask 523264
    %v210 = vsel %vm208, %v147, 0
    %212 = vmatprep.subr.bf16.mxu0 %v193
    %213 = vmatpush1.bf16.msra.mxu0 %v192
    %214 = vmatprep.subr.bf16.mxu0 %v195
    %215 = vmatpush1.bf16.msra.mxu0 %v194
    %216 = vmatprep.subr.bf16.mxu0 %v197
    %217 = vmatpush1.bf16.msra.mxu0 %v196
    %218 = vmatprep.subr.bf16.mxu0 %v199
    %219 = vmatpush1.bf16.msra.mxu0 %v198
    %220 = vmatprep.subr.bf16.mxu0 0
    %221 = vmatpush1.bf16.msra.mxu0 0
    %222 = vmatprep.subr.bf16.mxu0 0
    %223 = vmatpush1.bf16.msra.mxu0 0
    %224 = vmatprep.subr.bf16.mxu0 0
    %225 = vmatpush1.bf16.msra.mxu0 0
    %226 = vmatprep.subr.bf16.mxu0 0
    %227 = vmatpush1.bf16.msra.mxu0 0
    %228 = vmatprep.subr.bf16.mxu0 0
    %229 = vmatpush1.bf16.msra.mxu0 0
    %230 = vmatprep.subr.bf16.mxu0 0
    %231 = vmatpush1.bf16.msra.mxu0 0
    %232 = vmatprep.subr.bf16.mxu0 0
    %233 = vmatpush1.bf16.msra.mxu0 0
    %234 = vmatprep.subr.bf16.mxu0 0
    %235 = vmatpush1.bf16.msra.mxu0 0
    %236 = vmatprep.subr.bf16.mxu0 0
    %237 = vmatpush1.bf16.msra.mxu0 0
    %238 = vmatprep.subr.bf16.mxu0 0
    %239 = vmatpush1.bf16.msra.mxu0 0
    %240 = vmatprep.subr.bf16.mxu0 0
    %241 = vmatpush1.bf16.msra.mxu0 0
    %242 = vmatprep.subr.bf16.mxu0 0
    %243 = vmatpush1.bf16.msra.mxu0 0
    %244 = vmatprep.mubr.bf16.mxu0 0
    %245 = vmatmul.mubr.bf16.gmra.mrb[0].mxu0 %v210
    %v246 = vpop.f32.mrb[0].mxu0
    %v247 = vadd.f32 %v161, %v246
    %v248 = vpop.f32.mrb[0].mxu0
    %v249 = vadd.f32 %v165, %v248
    %v250 = vpop.f32.mrb[0].mxu0
    %v251 = vadd.f32 %v161, %v250
    %v252 = vpop.f32.mrb[0].mxu0
    %v253 = vadd.f32 %v165, %v252
    %254 = vdwg.mxu0
    %v255 = vpack.c.bf16 %v251, %v247
    %v256 = vpack.c.bf16 %v253, %v249
    %v259 = vunpack.c.l.b16 %v255
    %v260 = vunpack.c.l.b16 %v256
    %v261 = vunpack.c.h.b16 %v255
    %v262 = vunpack.c.h.b16 %v256
    %v263 = vpack.c.b16 %v260, %v259
    %v264 = vpack.c.b16 %v262, %v261
    %267 = vst [vmem:[#allocation9] sm:$0xff] %v263
    %268 = vst [vmem:[#allocation9 + $0x8] sm:$0xff] %v264
    // Predicated region
    $region38: #{tpu_custom_call.1} parent=1 // pred_check
      _
    $region39: #{tpu_custom_call.1} parent=1 // pred_check_branch
      %270 = sbr.rel (0) target = $region41
    $region40: #{tpu_custom_call.1} parent=1 // pred_region
      %s272 = ssub.s32 256, 256
      %273 = vsyncadd [#allocation5], %s272
      %s274 = sshll.u32 [#allocation9], 4
      %s275 = int_to_ptr.vmem [resolvable:$true] %s274
      %280 = dma.vmem_to_hbm [thread:$0]  %s275, 256, %s5, [#allocation5], 128, 128, 8
    $region41: #{tpu_custom_call.1} parent=1 // pred_fallthru
      _
    // Predicated region
    $region42: #{tpu_custom_call.1} parent=1 // pred_check
      _
    $region43: #{tpu_custom_call.1} parent=1 // pred_check_branch
      %282 = sbr.rel (0) target = $region45
    $region44: #{tpu_custom_call.1} parent=1 // pred_region
      %283 = dma.done [#allocation5], 256
    $region45: #{tpu_custom_call.1} parent=1 // pred_fallthru
      _
    %284 = vsyncpa [#allocation4], 1
    %285 = vsyncpa [#allocation7], 1
    %286 = vsyncpa [#allocation5], 1

// kernel: tpu_custom_call.1
$region0: #{tpu_custom_call.1}
  #allocation0 [shape = 'u32[]', space=smem, size = 0x4, offset = 0x4, fixed_abs, tag = 'smem constant byte address 0x4 - core index']
  #allocation1 [shape = 'u32[144,128]{1,0:T(1,128)}', space=vmem, size = 0x12000, scoped, tag = 'internal scratch']
  #allocation2 [shape = 'bf16[16,64]{1,0:T(16,128)(2,1)}', space=vmem, size = 0x1000, scoped, tag = 'scratch operand']
  %s0 = inlined_call_operand.hbm [shape: bf16[16,32], index: 0, kind: input, shape index: {}]
  %s1 = inlined_call_operand.hbm [shape: bf16[32,64], index: 1, kind: input, shape index: {}]
  %s2 = inlined_call_operand.vmem [shape: f32[1,64], index: 2, kind: input, shape index: {}]
  %s3 = inlined_call_operand.hbm [shape: bf16[64,256], index: 3, kind: input, shape index: {}]
  %s4 = inlined_call_operand.vmem [shape: f32[1,256], index: 4, kind: input, shape index: {}]
  %s5 = inlined_call_operand.hbm [shape: bf16[16,256], index: 5, kind: output, shape index: {}]
  %s6 = sld [smem:[#allocation0]]
  $region46: #{tpu_custom_call.1} parent=0
    _
  %s8 = ssub.s32 1, %s6
  %s9 = scalar_select 0, %s8, %s6
  $region1: #{tpu_custom_call.1} parent=0
    #allocation3 [shape = 'u8[4096]{0}', space=vmem, size = 0x1000, scoped, tag = 'input window, operand 0, single buffered']
    #allocation4 [shape = 's32[1]{0}', space=sflag, size = 0x4, scoped, tag = 'scoped memory for tpu_custom_call.1']
    #allocation5 [shape = 's32[1]{0}', space=sflag, size = 0x4, scoped, tag = 'scoped memory for tpu_custom_call.1']
    #allocation6 [shape = 'u8[8192]{0}', space=vmem, size = 0x2000, scoped, tag = 'input window, operand 1, single buffered']
    #allocation7 [shape = 's32[1]{0}', space=sflag, size = 0x4, scoped, tag = 'scoped memory for tpu_custom_call.1']
    #allocation8 [shape = 'u8[32768]{0}', space=vmem, size = 0x8000, scoped, tag = 'input window, operand 3, single buffered']
    #allocation9 [shape = 'u8[8192]{0}', space=vmem, size = 0x2000, scoped, tag = 'output window, operand 0, single buffered']
    %10 = vsyncpa [#allocation4], 0
    %11 = vsyncpa [#allocation7], 0
    %12 = vsyncpa [#allocation5], 0
    // Predicated region
    $region2: #{tpu_custom_call.1} parent=1 // pred_check
      _
    $region3: #{tpu_custom_call.1} parent=1 // pred_check_branch
      %14 = sbr.rel (0) target = $region5
    $region4: #{tpu_custom_call.1} parent=1 // pred_region
      %s16 = ssub.s32 128, 128
      %17 = vsyncadd [#allocation4], %s16
      %s18 = sshll.u32 [#allocation3], 4
      %s19 = int_to_ptr.vmem [resolvable:$true] %s18
      %24 = dma.hbm_to_vmem [thread:$0]  %s0, 128, %s19, [#allocation4], 64, 64, 4
    $region5: #{tpu_custom_call.1} parent=1 // pred_fallthru
      _
    // Predicated region
    $region6: #{tpu_custom_call.1} parent=1 // pred_check
      _
    $region7: #{tpu_custom_call.1} parent=1 // pred_check_branch
      %26 = sbr.rel (0) target = $region9
    $region8: #{tpu_custom_call.1} parent=1 // pred_region
      %s28 = ssub.s32 256, 256
      %29 = vsyncadd [#allocation7], %s28
      %s30 = sshll.u32 [#allocation6], 4
      %s31 = int_to_ptr.vmem [resolvable:$true] %s30
      %36 = dma.hbm_to_vmem [thread:$0]  %s1, 256, %s31, [#allocation7], 64, 64, 4
    $region9: #{tpu_custom_call.1} parent=1 // pred_fallthru
      _
    // Predicated region
    $region10: #{tpu_custom_call.1} parent=1 // pred_check
      _
    $region11: #{tpu_custom_call.1} parent=1 // pred_check_branch
      %38 = sbr.rel (0) target = $region13
    $region12: #{tpu_custom_call.1} parent=1 // pred_region
      _
    $region13: #{tpu_custom_call.1} parent=1 // pred_fallthru
      _
    // Predicated region
    $region14: #{tpu_custom_call.1} parent=1 // pred_check
      _
    $region15: #{tpu_custom_call.1} parent=1 // pred_check_branch
      %40 = sbr.rel (0) target = $region17
    $region16: #{tpu_custom_call.1} parent=1 // pred_region
      %s42 = ssub.s32 1024, 1024
      %43 = vsyncadd [#allocation7], %s42
      %s44 = sshll.u32 [#allocation8], 4
      %s45 = int_to_ptr.vmem [resolvable:$true] %s44
      %50 = dma.hbm_to_vmem [thread:$0]  %s3, 1024, %s45, [#allocation7], 128, 128, 8
    $region17: #{tpu_custom_call.1} parent=1 // pred_fallthru
      _
    // Predicated region
    $region18: #{tpu_custom_call.1} parent=1 // pred_check
      _
    $region19: #{tpu_custom_call.1} parent=1 // pred_check_branch
      %52 = sbr.rel (0) target = $region21
    $region20: #{tpu_custom_call.1} parent=1 // pred_region
      _
    $region21: #{tpu_custom_call.1} parent=1 // pred_fallthru
      _
    // Predicated region
    $region22: #{tpu_custom_call.1} parent=1 // pred_check
      _
    $region23: #{tpu_custom_call.1} parent=1 // pred_check_branch
      %54 = sbr.rel (0) target = $region25
    $region24: #{tpu_custom_call.1} parent=1 // pred_region
      %55 = dma.done [#allocation4], 128
    $region25: #{tpu_custom_call.1} parent=1 // pred_fallthru
      _
    // Predicated region
    $region26: #{tpu_custom_call.1} parent=1 // pred_check
      _
    $region27: #{tpu_custom_call.1} parent=1 // pred_check_branch
      %57 = sbr.rel (0) target = $region29
    $region28: #{tpu_custom_call.1} parent=1 // pred_region
      %58 = dma.done [#allocation7], 256
    $region29: #{tpu_custom_call.1} parent=1 // pred_fallthru
      _
    // Predicated region
    $region30: #{tpu_custom_call.1} parent=1 // pred_check
      _
    $region31: #{tpu_custom_call.1} parent=1 // pred_check_branch
      %60 = sbr.rel (0) target = $region33
    $region32: #{tpu_custom_call.1} parent=1 // pred_region
      %61 = dma.done [#allocation7], 1024
    $region33: #{tpu_custom_call.1} parent=1 // pred_fallthru
      _
    %p63 = scmp.eq.s32.totalorder 0, 0
    // Predicated region
    $region34: #{tpu_custom_call.1} parent=1 // pred_check
      %p64 = pneg %p63
    $region35: #{tpu_custom_call.1} parent=1 // pred_check_branch
      %66 = sbr.rel (%p64) target = $region37
    $region36: #{tpu_custom_call.1} parent=1 // pred_region
      %v67 = vld [vmem:[#allocation3] sm:$0xf]
      %v68 = vld [vmem:[#allocation3 + $0x4] sm:$0xf]
      %v69 = vld [vmem:[#allocation6] sm:$0xf]
      %v70 = vld [vmem:[#allocation6 + $0x4] sm:$0xf]
      %v71 = vld [vmem:[#allocation6 + $0x8] sm:$0xf]
      %v72 = vld [vmem:[#allocation6 + $0xc] sm:$0xf]
      %v73 = vld [vmem:[%s2] sm:$0x1]
      %v75 = vlaneseq
      %v76 = vshrl.u32 %v75, 7
      %v77 = vsub.s32 0, %v76
      %v78 = vrot.slane %v73, %v77
      %v82 = vunpack.c.l.b16 %v67
      %v83 = vunpack.c.l.b16 %v68
      %v84 = vpack.c.b16 %v83, %v82
      %v89 = vunpack.c.l.b16 %v69
      %v90 = vunpack.c.l.b16 %v70
      %v91 = vunpack.c.l.b16 %v71
      %v92 = vunpack.c.l.b16 %v72
      %v93 = vpack.c.b16 %v90, %v89
      %v94 = vpack.c.b16 %v92, %v91
      %vm97 = vcmask 261120
      %v99 = vsel %vm97, %v84, 0
      %101 = vmatprep.subr.bf16.mxu0 0
      %102 = vmatpush1.bf16.msra.mxu0 %v93
      %103 = vmatprep.subr.bf16.mxu0 0
      %104 = vmatpush1.bf16.msra.mxu0 %v94
      %105 = vmatprep.subr.bf16.mxu0 0
      %106 = vmatpush1.bf16.msra.mxu0 0
      %107 = vmatprep.subr.bf16.mxu0 0
      %108 = vmatpush1.bf16.msra.mxu0 0
      %109 = vmatprep.subr.bf16.mxu0 0
      %110 = vmatpush1.bf16.msra.mxu0 0
      %111 = vmatprep.subr.bf16.mxu0 0
      %112 = vmatpush1.bf16.msra.mxu0 0
      %113 = vmatprep.subr.bf16.mxu0 0
      %114 = vmatpush1.bf16.msra.mxu0 0
      %115 = vmatprep.subr.bf16.mxu0 0
      %116 = vmatpush1.bf16.msra.mxu0 0
      %117 = vmatprep.subr.bf16.mxu0 0
      %118 = vmatpush1.bf16.msra.mxu0 0
      %119 = vmatprep.subr.bf16.mxu0 0
      %120 = vmatpush1.bf16.msra.mxu0 0
      %121 = vmatprep.subr.bf16.mxu0 0
      %122 = vmatpush1.bf16.msra.mxu0 0
      %123 = vmatprep.subr.bf16.mxu0 0
      %124 = vmatpush1.bf16.msra.mxu0 0
      %125 = vmatprep.subr.bf16.mxu0 0
      %126 = vmatpush1.bf16.msra.mxu0 0
      %127 = vmatprep.subr.bf16.mxu0 0
      %128 = vmatpush1.bf16.msra.mxu0 0
      %129 = vmatprep.subr.bf16.mxu0 0
      %130 = vmatpush1.bf16.msra.mxu0 0
      %131 = vmatprep.subr.bf16.mxu0 0
      %132 = vmatpush1.bf16.msra.mxu0 0
      %133 = vmatprep.mubr.bf16.mxu0 0
      %134 = vmatmul.mubr.bf16.gmra.mrb[0].mxu0 %v99
      %v135 = vpop.f32.mrb[0].mxu0
      %v136 = vadd.f32 %v78, %v135
      %v137 = vpop.f32.mrb[0].mxu0
      %v138 = vpop.f32.mrb[0].mxu0
      %v139 = vadd.f32 %v78, %v138
      %v140 = vpop.f32.mrb[0].mxu0
      %141 = vdwg.mxu0
      %v142 = vtanh.pop %v136
      %v143 = vtanh.pop %v139
      %v144 = vpack.c.bf16 %v143, %v142
      %vm145 = vcmask 523264
      %146 = vst.msk [vmem:[#allocation2] sm:$0xff] %vm145, %v144
    $region37: #{tpu_custom_call.1} parent=1 // pred_fallthru
      _
    %v147 = vld [vmem:[#allocation2] sm:$0xff]
    %v148 = vld [vmem:[#allocation8] sm:$0xff]
    %v149 = vld [vmem:[#allocation8 + $0x8] sm:$0xff]
    %v150 = vld [vmem:[#allocation8 + $0x10] sm:$0xff]
    %v151 = vld [vmem:[#allocation8 + $0x18] sm:$0xff]
    %v152 = vld [vmem:[#allocation8 + $0x20] sm:$0xff]
    %v153 = vld [vmem:[#allocation8 + $0x28] sm:$0xff]
    %v154 = vld [vmem:[#allocation8 + $0x30] sm:$0xff]
    %v155 = vld [vmem:[#allocation8 + $0x38] sm:$0xff]
    %v156 = vld [vmem:[%s4] sm:$0x3]
    %v158 = vlaneseq
    %v159 = vshrl.u32 %v158, 7
    %v160 = vsub.s32 0, %v159
    %v161 = vrot.slane %v156, %v160
    %v162 = vlaneseq
    %v163 = vshrl.u32 %v162, 7
    %v164 = vsub.s32 1, %v163
    %v165 = vrot.slane %v156, %v164
    %v176 = vunpack.c.l.b16 %v148
    %v177 = vunpack.c.h.b16 %v148
    %v178 = vunpack.c.l.b16 %v149
    %v179 = vunpack.c.h.b16 %v149
    %v180 = vunpack.c.l.b16 %v150
    %v181 = vunpack.c.h.b16 %v150
    %v182 = vunpack.c.l.b16 %v151
    %v183 = vunpack.c.h.b16 %v151
    %v184 = vunpack.c.l.b16 %v152
    %v185 = vunpack.c.h.b16 %v152
    %v186 = vunpack.c.l.b16 %v153
    %v187 = vunpack.c.h.b16 %v153
    %v188 = vunpack.c.l.b16 %v154
    %v189 = vunpack.c.h.b16 %v154
    %v190 = vunpack.c.l.b16 %v155
    %v191 = vunpack.c.h.b16 %v155
    %v192 = vpack.c.b16 %v178, %v176
    %v193 = vpack.c.b16 %v179, %v177
    %v194 = vpack.c.b16 %v182, %v180
    %v195 = vpack.c.b16 %v183, %v181
    %v196 = vpack.c.b16 %v186, %v184
    %v197 = vpack.c.b16 %v187, %v185
    %v198 = vpack.c.b16 %v190, %v188
    %v199 = vpack.c.b16 %v191, %v189
    %vm208 = vcmask 523264
    %v210 = vsel %vm208, %v147, 0
    %212 = vmatprep.subr.bf16.mxu0 %v193
    %213 = vmatpush1.bf16.msra.mxu0 %v192
    %214 = vmatprep.subr.bf16.mxu0 %v195
    %215 = vmatpush1.bf16.msra.mxu0 %v194
    %216 = vmatprep.subr.bf16.mxu0 %v197
    %217 = vmatpush1.bf16.msra.mxu0 %v196
    %218 = vmatprep.subr.bf16.mxu0 %v199
    %219 = vmatpush1.bf16.msra.mxu0 %v198
    %220 = vmatprep.subr.bf16.mxu0 0
    %221 = vmatpush1.bf16.msra.mxu0 0
    %222 = vmatprep.subr.bf16.mxu0 0
    %223 = vmatpush1.bf16.msra.mxu0 0
    %224 = vmatprep.subr.bf16.mxu0 0
    %225 = vmatpush1.bf16.msra.mxu0 0
    %226 = vmatprep.subr.bf16.mxu0 0
    %227 = vmatpush1.bf16.msra.mxu0 0
    %228 = vmatprep.subr.bf16.mxu0 0
    %229 = vmatpush1.bf16.msra.mxu0 0
    %230 = vmatprep.subr.bf16.mxu0 0
    %231 = vmatpush1.bf16.msra.mxu0 0
    %232 = vmatprep.subr.bf16.mxu0 0
    %233 = vmatpush1.bf16.msra.mxu0 0
    %234 = vmatprep.subr.bf16.mxu0 0
    %235 = vmatpush1.bf16.msra.mxu0 0
    %236 = vmatprep.subr.bf16.mxu0 0
    %237 = vmatpush1.bf16.msra.mxu0 0
    %238 = vmatprep.subr.bf16.mxu0 0
    %239 = vmatpush1.bf16.msra.mxu0 0
    %240 = vmatprep.subr.bf16.mxu0 0
    %241 = vmatpush1.bf16.msra.mxu0 0
    %242 = vmatprep.subr.bf16.mxu0 0
    %243 = vmatpush1.bf16.msra.mxu0 0
    %244 = vmatprep.mubr.bf16.mxu0 0
    %245 = vmatmul.mubr.bf16.gmra.mrb[0].mxu0 %v210
    %v246 = vpop.f32.mrb[0].mxu0
    %v247 = vadd.f32 %v161, %v246
    %v248 = vpop.f32.mrb[0].mxu0
    %v249 = vadd.f32 %v165, %v248
    %v250 = vpop.f32.mrb[0].mxu0
    %v251 = vadd.f32 %v161, %v250
    %v252 = vpop.f32.mrb[0].mxu0
    %v253 = vadd.f32 %v165, %v252
    %254 = vdwg.mxu0
    %v255 = vpack.c.bf16 %v251, %v247
    %v256 = vpack.c.bf16 %v253, %v249
    %v259 = vunpack.c.l.b16 %v255
    %v260 = vunpack.c.l.b16 %v256
    %v261 = vunpack.c.h.b16 %v255
    %v262 = vunpack.c.h.b16 %v256
    %v263 = vpack.c.b16 %v260, %v259
    %v264 = vpack.c.b16 %v262, %v261
    %267 = vst [vmem:[#allocation9] sm:$0xff] %v263
    %268 = vst [vmem:[#allocation9 + $0x8] sm:$0xff] %v264
    // Predicated region
    $region38: #{tpu_custom_call.1} parent=1 // pred_check
      _
    $region39: #{tpu_custom_call.1} parent=1 // pred_check_branch
      %270 = sbr.rel (0) target = $region41
    $region40: #{tpu_custom_call.1} parent=1 // pred_region
      %s272 = ssub.s32 256, 256
      %273 = vsyncadd [#allocation5], %s272
      %s274 = sshll.u32 [#allocation9], 4
      %s275 = int_to_ptr.vmem [resolvable:$true] %s274
      %280 = dma.vmem_to_hbm [thread:$0]  %s275, 256, %s5, [#allocation5], 128, 128, 8
    $region41: #{tpu_custom_call.1} parent=1 // pred_fallthru
      _
    // Predicated region
    $region42: #{tpu_custom_call.1} parent=1 // pred_check
      _
    $region43: #{tpu_custom_call.1} parent=1 // pred_check_branch
      %282 = sbr.rel (0) target = $region45
    $region44: #{tpu_custom_call.1} parent=1 // pred_region
      %283 = dma.done [#allocation5], 256
    $region45: #{tpu_custom_call.1} parent=1 // pred_fallthru
      _
    %284 = vsyncpa [#allocation4], 1
    %285 = vsyncpa [#allocation7], 1
    %286 = vsyncpa [#allocation5], 1

</llo_original>
